<compile_context>
chip_gen: v7x
topology: tpu7x:2x2x1
jax: 0.10.0
libtpu: 0.0.40
codegen_flags: <defaults>
</compile_context>

<pallas_src>
import functools
import math

import jax
import jax.numpy as jnp
from jax.experimental import pallas as pl
from jax.experimental.pallas import tpu as pltpu


def _glu_kernel(x_ref, wa_ref, ba_ref, wb_ref, bb_ref, wo_ref, bo_ref,
                ws_ref, bs_ref, out_ref, skip_ref, *, T, K, dilation, pad):
    # x_ref:   (1, T + 2*pad, Cres)  zero-padded input, one batch element
    # wa_ref:  (K*Cres, Cg2)  conv weight, tanh half     ba_ref: (1, Cg2)
    # wb_ref:  (K*Cres, Cg2)  conv weight, sigmoid half  bb_ref: (1, Cg2)
    # wo_ref:  (Cg2, Cres)    1x1 "out" conv             bo_ref: (1, Cres)
    # ws_ref:  (Cg2, Cskip)   1x1 "skip" conv            bs_ref: (1, Cskip)
    # out_ref: (1, T, Cres)   skip_ref: (1, T, Cskip)
    x = x_ref[0]                                           # (T + 2*pad, Cres)

    # im2col slab: one (T, K*Cres) matmul per gate half instead of K tiny ones.
    xcol = jnp.concatenate(
        [x[k * dilation:k * dilation + T, :] for k in range(K)], axis=-1)

    a = jnp.dot(xcol, wa_ref[...], preferred_element_type=jnp.float32) + ba_ref[...]
    b = jnp.dot(xcol, wb_ref[...], preferred_element_type=jnp.float32) + bb_ref[...]
    g = jnp.tanh(a) * (1.0 / (1.0 + jnp.exp(-b)))          # GLU: tanh(a)*sigmoid(b)

    s = jnp.dot(g, ws_ref[...], preferred_element_type=jnp.float32) + bs_ref[...]
    o = jnp.dot(g, wo_ref[...], preferred_element_type=jnp.float32) + bo_ref[...]

    res = x[pad:pad + T, :]                                # the original (unpadded) x
    out_ref[0] = ((o + res) * jnp.float32(math.sqrt(0.5))).astype(out_ref.dtype)
    skip_ref[0] = s.astype(skip_ref.dtype)


def make_glu_params(key, residual_channels, gate_channels, kernel_size,
                    skip_out_channels=None, dilation=1):
    """Deterministic synthetic parameters in PyTorch layouts."""
    if skip_out_channels is None:
        skip_out_channels = residual_channels
    pad = (kernel_size - 1) // 2 * dilation
    k1, k2, k3, k4, k5, k6 = jax.random.split(key, 6)
    w_conv = 0.1 * jax.random.normal(
        k1, (gate_channels, residual_channels, kernel_size), jnp.float32)
    b_conv = 0.1 * jax.random.normal(k2, (gate_channels,), jnp.float32)
    w_out = 0.1 * jax.random.normal(
        k3, (residual_channels, gate_channels // 2, 1), jnp.float32)
    b_out = 0.1 * jax.random.normal(k4, (residual_channels,), jnp.float32)
    w_skip = 0.1 * jax.random.normal(
        k5, (skip_out_channels, gate_channels // 2, 1), jnp.float32)
    b_skip = 0.1 * jax.random.normal(k6, (skip_out_channels,), jnp.float32)
    return dict(w_conv=w_conv, b_conv=b_conv, w_out=w_out, b_out=b_out,
                w_skip=w_skip, b_skip=b_skip,
                kernel_size=kernel_size, dilation=dilation, pad=pad)


def _pack_kernel_weights(p):
    """Offline repack of PyTorch-layout weights into matmul-ready matrices."""
    K = p["kernel_size"]
    Cg, Cres, _ = p["w_conv"].shape
    Cg2 = Cg // 2
    # (Cgate, Cres, K) -> (K, Cres, Cgate) -> (K*Cres, Cgate); row index = k*Cres + cin
    w_mat = jnp.transpose(p["w_conv"], (2, 1, 0)).reshape(K * Cres, Cg)
    wa, wb = w_mat[:, :Cg2], w_mat[:, Cg2:]                 # tanh half / sigmoid half
    ba, bb = p["b_conv"][:Cg2][None, :], p["b_conv"][Cg2:][None, :]
    wo = jnp.transpose(p["w_out"][:, :, 0])                 # (Cg2, Cres)
    bo = p["b_out"][None, :]
    ws = jnp.transpose(p["w_skip"][:, :, 0])                # (Cg2, Cskip)
    bs = p["b_skip"][None, :]
    return wa, ba, wb, bb, wo, bo, ws, bs


def residual_conv1d_glu_forward(x_nct, p):
    """x_nct: (B, Cres, T) — PyTorch layout. Returns (out (B,Cres,T), skip (B,Cskip,T))."""
    B, Cres, T = x_nct.shape
    K, d, pad = p["kernel_size"], p["dilation"], p["pad"]
    assert K % 2 == 1, "odd kernel_size assumed ('same' output length)"
    wa, ba, wb, bb, wo, bo, ws, bs = _pack_kernel_weights(p)
    Cg2, Cskip = wa.shape[1], ws.shape[1]

    x_btc = jnp.transpose(x_nct, (0, 2, 1))                 # (B, T, Cres)
    x_padded = jnp.pad(x_btc, ((0, 0), (pad, pad), (0, 0)))  # padded once, only here
    Tpad = T + 2 * pad

    kernel = functools.partial(_glu_kernel, T=T, K=K, dilation=d, pad=pad)
    out, skip = pl.pallas_call(
        kernel,
        out_shape=(jax.ShapeDtypeStruct((B, T, Cres), x_nct.dtype),
                   jax.ShapeDtypeStruct((B, T, Cskip), x_nct.dtype)),
        grid_spec=pltpu.PrefetchScalarGridSpec(
            num_scalar_prefetch=0,
            grid=(B,),
            in_specs=[
                pl.BlockSpec((1, Tpad, Cres), lambda b: (b, 0, 0)),
                pl.BlockSpec((K * Cres, Cg2), lambda b: (0, 0)),
                pl.BlockSpec((1, Cg2), lambda b: (0, 0)),
                pl.BlockSpec((K * Cres, Cg2), lambda b: (0, 0)),
                pl.BlockSpec((1, Cg2), lambda b: (0, 0)),
                pl.BlockSpec((Cg2, Cres), lambda b: (0, 0)),
                pl.BlockSpec((1, Cres), lambda b: (0, 0)),
                pl.BlockSpec((Cg2, Cskip), lambda b: (0, 0)),
                pl.BlockSpec((1, Cskip), lambda b: (0, 0)),
            ],
            out_specs=[
                pl.BlockSpec((1, T, Cres), lambda b: (b, 0, 0)),
                pl.BlockSpec((1, T, Cskip), lambda b: (b, 0, 0)),
            ],
        ),
        compiler_params=pltpu.CompilerParams(
            dimension_semantics=("parallel",)),
    )(x_padded, wa, ba, wb, bb, wo, bo, ws, bs)

    return jnp.transpose(out, (0, 2, 1)), jnp.transpose(skip, (0, 2, 1))


def residual_conv1d_glu_reference(x, p):
    """Plain-JAX reference (lax conv path) for a correctness cross-check."""
    dn = ("NCH", "OIH", "NCH")
    prec = jax.lax.Precision.HIGHEST
    z = jax.lax.conv_general_dilated(
        x, p["w_conv"], window_strides=(1,), padding=[(p["pad"], p["pad"])],
        rhs_dilation=(p["dilation"],), dimension_numbers=dn, precision=prec)
    z = z + p["b_conv"][None, :, None]
    Cg2 = z.shape[1] // 2
    a, b = z[:, :Cg2, :], z[:, Cg2:, :]
    g = jnp.tanh(a) * (1.0 / (1.0 + jnp.exp(-b)))
    s = jax.lax.conv_general_dilated(
        g, p["w_skip"], (1,), [(0, 0)], dimension_numbers=dn,
        precision=prec) + p["b_skip"][None, :, None]
    o = jax.lax.conv_general_dilated(
        g, p["w_out"], (1,), [(0, 0)], dimension_numbers=dn,
        precision=prec) + p["b_out"][None, :, None]
    o = (o + x) * math.sqrt(0.5)
    return o, s


if __name__ == "__main__":
    # Small shapes: B=2, residual=32, gate=64, skip=32, k=3, dilation=2, T=16.
    B, Cres, Cgate, Cskip, K, dil, T = 2, 32, 64, 32, 3, 2, 16
    key = jax.random.PRNGKey(0)
    kx, kp = jax.random.split(key)
    x = jax.random.normal(kx, (B, Cres, T), jnp.float32)
    params = make_glu_params(kp, Cres, Cgate, K, skip_out_channels=Cskip,
                             dilation=dil)

    out, skip = residual_conv1d_glu_forward(x, params)
    out = jax.block_until_ready(out)
    skip = jax.block_until_ready(skip)
    assert out.shape == (B, Cres, T), out.shape
    assert skip.shape == (B, Cskip, T), skip.shape

    ref_out, ref_skip = residual_conv1d_glu_reference(x, params)
    ref_out = jax.block_until_ready(ref_out)
    ref_skip = jax.block_until_ready(ref_skip)
    assert jnp.allclose(out, ref_out, atol=1e-4, rtol=1e-4), \
        float(jnp.max(jnp.abs(out - ref_out)))
    assert jnp.allclose(skip, ref_skip, atol=1e-4, rtol=1e-4), \
        float(jnp.max(jnp.abs(skip - ref_skip)))

    print("KERNEL_OK")
</pallas_src>

<mosaic_0001>
module attributes {stable_mosaic.version = 11 : i64} {
  func.func @_glu_kernel(%arg0: i32, %arg1: memref<1x20x32xf32, #tpu.memory_space<vmem>>, %arg2: memref<96x32xf32, #tpu.memory_space<vmem>>, %arg3: memref<1x32xf32, #tpu.memory_space<vmem>>, %arg4: memref<96x32xf32, #tpu.memory_space<vmem>>, %arg5: memref<1x32xf32, #tpu.memory_space<vmem>>, %arg6: memref<32x32xf32, #tpu.memory_space<vmem>>, %arg7: memref<1x32xf32, #tpu.memory_space<vmem>>, %arg8: memref<32x32xf32, #tpu.memory_space<vmem>>, %arg9: memref<1x32xf32, #tpu.memory_space<vmem>>, %arg10: memref<1x16x32xf32, #tpu.memory_space<vmem>>, %arg11: memref<1x16x32xf32, #tpu.memory_space<vmem>>) attributes {dimension_semantics = [#tpu.dimension_semantics<parallel>], iteration_bounds = array<i64: 2>, scalar_prefetch = 0 : i64, scratch_operands = 0 : i64, tpu.core_type = #tpu.core_type<tc>, window_params = [{transform_indices = @transform_0, window_bounds = array<i64: 1, 20, 32>}, {pipeline_mode = #tpu.pipeline_mode<synchronous>, transform_indices = @transform_1, window_bounds = array<i64: 96, 32>}, {pipeline_mode = #tpu.pipeline_mode<synchronous>, transform_indices = @transform_2, window_bounds = array<i64: 1, 32>}, {pipeline_mode = #tpu.pipeline_mode<synchronous>, transform_indices = @transform_3, window_bounds = array<i64: 96, 32>}, {pipeline_mode = #tpu.pipeline_mode<synchronous>, transform_indices = @transform_4, window_bounds = array<i64: 1, 32>}, {pipeline_mode = #tpu.pipeline_mode<synchronous>, transform_indices = @transform_5, window_bounds = array<i64: 32, 32>}, {pipeline_mode = #tpu.pipeline_mode<synchronous>, transform_indices = @transform_6, window_bounds = array<i64: 1, 32>}, {pipeline_mode = #tpu.pipeline_mode<synchronous>, transform_indices = @transform_7, window_bounds = array<i64: 32, 32>}, {pipeline_mode = #tpu.pipeline_mode<synchronous>, transform_indices = @transform_8, window_bounds = array<i64: 1, 32>}, {transform_indices = @transform_9, window_bounds = array<i64: 1, 16, 32>}, {transform_indices = @transform_10, window_bounds = array<i64: 1, 16, 32>}]} {
    %c0 = arith.constant 0 : index
    %c0_0 = arith.constant 0 : index
    %c0_1 = arith.constant 0 : index
    %0 = vector.load %arg1[%c0, %c0_0, %c0_1] : memref<1x20x32xf32, #tpu.memory_space<vmem>>, vector<1x20x32xf32>
    %1 = vector.shape_cast %0 : vector<1x20x32xf32> to vector<20x32xf32>
    %2 = vector.extract_strided_slice %1 {offsets = [0, 0], sizes = [16, 32], strides = [1, 1]} : vector<20x32xf32> to vector<16x32xf32>
    %3 = vector.extract_strided_slice %1 {offsets = [2, 0], sizes = [16, 32], strides = [1, 1]} : vector<20x32xf32> to vector<16x32xf32>
    %4 = vector.extract_strided_slice %1 {offsets = [4, 0], sizes = [16, 32], strides = [1, 1]} : vector<20x32xf32> to vector<16x32xf32>
    %5 = tpu.concatenate %2, %3, %4 in 1 : vector<16x32xf32>, vector<16x32xf32>, vector<16x32xf32> -> vector<16x96xf32>
    %c0_2 = arith.constant 0 : index
    %c0_3 = arith.constant 0 : index
    %6 = vector.load %arg2[%c0_2, %c0_3] : memref<96x32xf32, #tpu.memory_space<vmem>>, vector<96x32xf32>
    %cst = arith.constant dense<0.000000e+00> : vector<16x32xf32>
    %7 = tpu.matmul %5, %6, %cst {dimension_numbers = #tpu.dot_dimension_numbers<[1], [0], [0], [1], [0, 0, 1, 1], [], []>} : vector<16x96xf32>, vector<96x32xf32>, vector<16x32xf32> -> vector<16x32xf32>
    %c0_4 = arith.constant 0 : index
    %c0_5 = arith.constant 0 : index
    %8 = vector.load %arg3[%c0_4, %c0_5] : memref<1x32xf32, #tpu.memory_space<vmem>>, vector<1x32xf32>
    %9 = vector.broadcast %8 : vector<1x32xf32> to vector<16x32xf32>
    %10 = arith.addf %7, %9 : vector<16x32xf32>
    %c0_6 = arith.constant 0 : index
    %c0_7 = arith.constant 0 : index
    %11 = vector.load %arg4[%c0_6, %c0_7] : memref<96x32xf32, #tpu.memory_space<vmem>>, vector<96x32xf32>
    %cst_8 = arith.constant dense<0.000000e+00> : vector<16x32xf32>
    %12 = tpu.matmul %5, %11, %cst_8 {dimension_numbers = #tpu.dot_dimension_numbers<[1], [0], [0], [1], [0, 0, 1, 1], [], []>} : vector<16x96xf32>, vector<96x32xf32>, vector<16x32xf32> -> vector<16x32xf32>
    %c0_9 = arith.constant 0 : index
    %c0_10 = arith.constant 0 : index
    %13 = vector.load %arg5[%c0_9, %c0_10] : memref<1x32xf32, #tpu.memory_space<vmem>>, vector<1x32xf32>
    %14 = vector.broadcast %13 : vector<1x32xf32> to vector<16x32xf32>
    %15 = arith.addf %12, %14 : vector<16x32xf32>
    %16 = math.tanh %10 : vector<16x32xf32>
    %cst_11 = arith.constant 0.000000e+00 : f32
    %17 = vector.broadcast %cst_11 : f32 to vector<16x32xf32>
    %18 = arith.subf %17, %15 : vector<16x32xf32>
    %19 = math.exp %18 : vector<16x32xf32>
    %cst_12 = arith.constant 1.000000e+00 : f32
    %20 = vector.broadcast %cst_12 : f32 to vector<16x32xf32>
    %21 = arith.addf %20, %19 : vector<16x32xf32>
    %cst_13 = arith.constant 1.000000e+00 : f32
    %22 = vector.broadcast %cst_13 : f32 to vector<16x32xf32>
    %23 = arith.divf %22, %21 : vector<16x32xf32>
    %24 = arith.mulf %16, %23 : vector<16x32xf32>
    %c0_14 = arith.constant 0 : index
    %c0_15 = arith.constant 0 : index
    %25 = vector.load %arg8[%c0_14, %c0_15] : memref<32x32xf32, #tpu.memory_space<vmem>>, vector<32x32xf32>
    %cst_16 = arith.constant dense<0.000000e+00> : vector<16x32xf32>
    %26 = tpu.matmul %24, %25, %cst_16 {dimension_numbers = #tpu.dot_dimension_numbers<[1], [0], [0], [1], [0, 0, 1, 1], [], []>} : vector<16x32xf32>, vector<32x32xf32>, vector<16x32xf32> -> vector<16x32xf32>
    %c0_17 = arith.constant 0 : index
    %c0_18 = arith.constant 0 : index
    %27 = vector.load %arg9[%c0_17, %c0_18] : memref<1x32xf32, #tpu.memory_space<vmem>>, vector<1x32xf32>
    %28 = vector.broadcast %27 : vector<1x32xf32> to vector<16x32xf32>
    %29 = arith.addf %26, %28 : vector<16x32xf32>
    %c0_19 = arith.constant 0 : index
    %c0_20 = arith.constant 0 : index
    %30 = vector.load %arg6[%c0_19, %c0_20] : memref<32x32xf32, #tpu.memory_space<vmem>>, vector<32x32xf32>
    %cst_21 = arith.constant dense<0.000000e+00> : vector<16x32xf32>
    %31 = tpu.matmul %24, %30, %cst_21 {dimension_numbers = #tpu.dot_dimension_numbers<[1], [0], [0], [1], [0, 0, 1, 1], [], []>} : vector<16x32xf32>, vector<32x32xf32>, vector<16x32xf32> -> vector<16x32xf32>
    %c0_22 = arith.constant 0 : index
    %c0_23 = arith.constant 0 : index
    %32 = vector.load %arg7[%c0_22, %c0_23] : memref<1x32xf32, #tpu.memory_space<vmem>>, vector<1x32xf32>
    %33 = vector.broadcast %32 : vector<1x32xf32> to vector<16x32xf32>
    %34 = arith.addf %31, %33 : vector<16x32xf32>
    %35 = vector.extract_strided_slice %1 {offsets = [2, 0], sizes = [16, 32], strides = [1, 1]} : vector<20x32xf32> to vector<16x32xf32>
    %36 = arith.addf %34, %35 : vector<16x32xf32>
    %cst_24 = arith.constant 0.707106769 : f32
    %37 = vector.broadcast %cst_24 : f32 to vector<16x32xf32>
    %38 = arith.mulf %36, %37 : vector<16x32xf32>
    %c0_25 = arith.constant 0 : index
    %c0_26 = arith.constant 0 : index
    %c0_27 = arith.constant 0 : index
    %39 = vector.load %arg10[%c0_25, %c0_26, %c0_27] : memref<1x16x32xf32, #tpu.memory_space<vmem>>, vector<1x16x32xf32>
    %40 = vector.shape_cast %39 : vector<1x16x32xf32> to vector<16x32xf32>
    %41 = vector.shape_cast %38 : vector<16x32xf32> to vector<1x16x32xf32>
    tpu.vector_store %arg10[%c0_25, %c0_26, %c0_27], %41 {strides = array<i32>} : memref<1x16x32xf32, #tpu.memory_space<vmem>>, vector<1x16x32xf32>,
    %c0_28 = arith.constant 0 : index
    %c0_29 = arith.constant 0 : index
    %c0_30 = arith.constant 0 : index
    %42 = vector.load %arg11[%c0_28, %c0_29, %c0_30] : memref<1x16x32xf32, #tpu.memory_space<vmem>>, vector<1x16x32xf32>
    %43 = vector.shape_cast %42 : vector<1x16x32xf32> to vector<16x32xf32>
    %44 = vector.shape_cast %29 : vector<16x32xf32> to vector<1x16x32xf32>
    tpu.vector_store %arg11[%c0_28, %c0_29, %c0_30], %44 {strides = array<i32>} : memref<1x16x32xf32, #tpu.memory_space<vmem>>, vector<1x16x32xf32>,
    return
  }
  func.func @transform_0(%arg0: i32) -> (i32, i32, i32) {
    %c0_i32 = arith.constant 0 : i32
    %c0_i32_0 = arith.constant 0 : i32
    %c0_i32_1 = arith.constant 0 : i32
    return %arg0, %c0_i32, %c0_i32_0 : i32, i32, i32
  }
  func.func @transform_1(%arg0: i32) -> (i32, i32) {
    %c0_i32 = arith.constant 0 : i32
    %c0_i32_0 = arith.constant 0 : i32
    %c0_i32_1 = arith.constant 0 : i32
    return %c0_i32, %c0_i32_0 : i32, i32
  }
  func.func @transform_2(%arg0: i32) -> (i32, i32) {
    %c0_i32 = arith.constant 0 : i32
    %c0_i32_0 = arith.constant 0 : i32
    %c0_i32_1 = arith.constant 0 : i32
    return %c0_i32, %c0_i32_0 : i32, i32
  }
  func.func @transform_3(%arg0: i32) -> (i32, i32) {
    %c0_i32 = arith.constant 0 : i32
    %c0_i32_0 = arith.constant 0 : i32
    %c0_i32_1 = arith.constant 0 : i32
    return %c0_i32, %c0_i32_0 : i32, i32
  }
  func.func @transform_4(%arg0: i32) -> (i32, i32) {
    %c0_i32 = arith.constant 0 : i32
    %c0_i32_0 = arith.constant 0 : i32
    %c0_i32_1 = arith.constant 0 : i32
    return %c0_i32, %c0_i32_0 : i32, i32
  }
  func.func @transform_5(%arg0: i32) -> (i32, i32) {
    %c0_i32 = arith.constant 0 : i32
    %c0_i32_0 = arith.constant 0 : i32
    %c0_i32_1 = arith.constant 0 : i32
    return %c0_i32, %c0_i32_0 : i32, i32
  }
  func.func @transform_6(%arg0: i32) -> (i32, i32) {
    %c0_i32 = arith.constant 0 : i32
    %c0_i32_0 = arith.constant 0 : i32
    %c0_i32_1 = arith.constant 0 : i32
    return %c0_i32, %c0_i32_0 : i32, i32
  }
  func.func @transform_7(%arg0: i32) -> (i32, i32) {
    %c0_i32 = arith.constant 0 : i32
    %c0_i32_0 = arith.constant 0 : i32
    %c0_i32_1 = arith.constant 0 : i32
    return %c0_i32, %c0_i32_0 : i32, i32
  }
  func.func @transform_8(%arg0: i32) -> (i32, i32) {
    %c0_i32 = arith.constant 0 : i32
    %c0_i32_0 = arith.constant 0 : i32
    %c0_i32_1 = arith.constant 0 : i32
    return %c0_i32, %c0_i32_0 : i32, i32
  }
  func.func @transform_9(%arg0: i32) -> (i32, i32, i32) {
    %c0_i32 = arith.constant 0 : i32
    %c0_i32_0 = arith.constant 0 : i32
    %c0_i32_1 = arith.constant 0 : i32
    return %arg0, %c0_i32, %c0_i32_0 : i32, i32, i32
  }
  func.func @transform_10(%arg0: i32) -> (i32, i32, i32) {
    %c0_i32 = arith.constant 0 : i32
    %c0_i32_0 = arith.constant 0 : i32
    %c0_i32_1 = arith.constant 0 : i32
    return %arg0, %c0_i32, %c0_i32_0 : i32, i32, i32
  }
}

</mosaic_0001>

<llo_original>
// kernel: tpu_custom_call.1
$region0: #{tpu_custom_call.1}
  #allocation0 [shape = 'u32[]', space=smem, size = 0x4, offset = 0x4, fixed_abs, tag = 'smem constant byte address 0x4 - core index']
  #allocation1 [shape = 'u32[144,128]{1,0:T(1,128)}', space=vmem, size = 0x12000, scoped, tag = 'internal scratch']
  %s0 = inlined_call_operand.vmem [shape: f32[2,20,32], index: 0, kind: input, shape index: {}]
  %s1 = inlined_call_operand.vmem [shape: f32[96,32], index: 1, kind: input, shape index: {}]
  %s2 = inlined_call_operand.vmem [shape: f32[1,32], index: 2, kind: input, shape index: {}]
  %s3 = inlined_call_operand.vmem [shape: f32[96,32], index: 3, kind: input, shape index: {}]
  %s4 = inlined_call_operand.vmem [shape: f32[1,32], index: 4, kind: input, shape index: {}]
  %s5 = inlined_call_operand.vmem [shape: f32[32,32], index: 5, kind: input, shape index: {}]
  %s6 = inlined_call_operand.vmem [shape: f32[1,32], index: 6, kind: input, shape index: {}]
  %s7 = inlined_call_operand.vmem [shape: f32[32,32], index: 7, kind: input, shape index: {}]
  %s8 = inlined_call_operand.vmem [shape: f32[1,32], index: 8, kind: input, shape index: {}]
  %s9 = inlined_call_operand.hbm [shape: f32[2,16,32], index: 9, kind: output, shape index: {0}]
  %s10 = inlined_call_operand.hbm [shape: f32[2,16,32], index: 10, kind: output, shape index: {1}]
  %11 = xla_tuple %s9, %s10
  %s12 = sld [smem:[#allocation0]]
  $region77: #{tpu_custom_call.1} parent=0
    _
  %s14 = ssub.s32 1, %s12
  %s15 = scalar_select 0, %s14, %s12
  $region1: #{tpu_custom_call.1} parent=0
    #allocation2 [shape = 'u8[16384]{0}', space=vmem, size = 0x4000, scoped, tag = 'output window, operand 0']
    #allocation3 [shape = 's32[2]{0}', space=sflag, size = 0x8, scoped, tag = 'scoped memory for tpu_custom_call.1']
    #allocation4 [shape = 'u8[16384]{0}', space=vmem, size = 0x4000, scoped, tag = 'output window, operand 1']
    #allocation5 [shape = 's32[2]{0}', space=sflag, size = 0x8, scoped, tag = 'scoped memory for tpu_custom_call.1']
    %16 = vsyncpa [#allocation3], 0
    %s17 = scalar_lea.sflag [#allocation3], 1
    %18 = vsyncpa %s17, 0
    %19 = vsyncpa [#allocation5], 0
    %s20 = scalar_lea.sflag [#allocation5], 1
    %21 = vsyncpa %s20, 0
    loop: start=0, step=1, limit=4
    $region2: #{tpu_custom_call.1} parent=1 // loop_pre_header
      _
    $region3: #{tpu_custom_call.1} parent=1 // loop_header
      %s23 = sphi 0, %s27
      %p24 = scmp.ge.s32.totalorder %s23, 4
      %s33 = sphi 0, %s35
      %s36 = sphi 0, %s33
      %s37 = sphi 0, %s36
      %s53 = sphi 0, %s37
      %s57 = sphi 0, %s57
      %s59 = sphi 0, %s57
      %s60 = sphi 0, %s59
      %s74 = sphi 0, %s60
      %s78 = sphi 0, %s78
      %s80 = sphi 0, %s78
      %s81 = sphi 0, %s80
      %s95 = sphi 0, %s81
      %s99 = sphi 0, %s99
      %s101 = sphi 0, %s99
      %s102 = sphi 0, %s101
      %s116 = sphi 0, %s102
      %s120 = sphi 0, %s120
      %s122 = sphi 0, %s120
      %s123 = sphi 0, %s122
      %s137 = sphi 0, %s123
      %s141 = sphi 0, %s141
      %s143 = sphi 0, %s141
      %s144 = sphi 0, %s143
      %s158 = sphi 0, %s144
      %s162 = sphi 0, %s162
      %s164 = sphi 0, %s162
      %s165 = sphi 0, %s164
      %s179 = sphi 0, %s165
      %s183 = sphi 0, %s183
      %s185 = sphi 0, %s183
      %s186 = sphi 0, %s185
      %s200 = sphi 0, %s186
      %s204 = sphi 0, %s204
      %s206 = sphi 0, %s204
      %s207 = sphi 0, %s206
      %s221 = sphi 0, %s207
      %s227 = sphi 0, %s229
      %s230 = sphi 0, %s227
      %s231 = sphi 0, %s230
      %s247 = sphi 0, %s231
      %s253 = sphi 0, %s255
      %s256 = sphi 0, %s253
      %s257 = sphi 0, %s256
      %s273 = sphi 0, %s257
    $region4: #{tpu_custom_call.1} parent=1 // loop_header_branch
      %26 = sbr.rel (%p24) target = $region8
    $region5: #{tpu_custom_call.1} parent=1 // loop_body
      %s28 = ssub.s32 %s23, 1
      %s29 = ssub.s32 %s23, 2
      %s30 = sadd.s32 %s23, 1
      %s31 = ssub.s32 %s23, %s30
      %p32 = scmp.eq.s32.totalorder %s31, 0
      %s34 = sadd.s32 %s33, 1
      %s35 = scalar_select %p32, %s33, %s34
      %p38 = pneg %p32
      %p39 = scmp.eq.s32.totalorder %s23, 1
      %p40 = por %p38, %p39
      %p41 = scmp.ne.s32.totalorder %s33, %s36
      %p42 = scmp.eq.s32.totalorder %s23, 0
      %p43 = por %p41, %p42
      %p44 = scmp.ne.s32.totalorder %s33, %s36
      %p45 = scmp.eq.s32.totalorder %s28, 1
      %p46 = por %p44, %p45
      %p47 = scmp.ne.s32.totalorder %s36, %s37
      %p48 = scmp.eq.s32.totalorder %s28, 0
      %p49 = por %p47, %p48
      %p50 = scmp.ne.s32.totalorder %s36, %s37
      %p51 = scmp.eq.s32.totalorder %s29, 1
      %p52 = por %p50, %p51
      %p54 = scmp.ne.s32.totalorder %s37, %s53
      %p55 = scmp.eq.s32.totalorder %s29, 0
      %p56 = por %p54, %p55
      %s58 = sadd.s32 %s57, 1
      %p61 = scmp.eq.s32.totalorder %s23, 1
      %p62 = scmp.ne.s32.totalorder %s57, %s59
      %p63 = scmp.eq.s32.totalorder %s23, 0
      %p64 = por %p62, %p63
      %p65 = scmp.ne.s32.totalorder %s57, %s59
      %p66 = scmp.eq.s32.totalorder %s28, 1
      %p67 = por %p65, %p66
      %p68 = scmp.ne.s32.totalorder %s59, %s60
      %p69 = scmp.eq.s32.totalorder %s28, 0
      %p70 = por %p68, %p69
      %p71 = scmp.ne.s32.totalorder %s59, %s60
      %p72 = scmp.eq.s32.totalorder %s29, 1
      %p73 = por %p71, %p72
      %p75 = scmp.ne.s32.totalorder %s60, %s74
      %p76 = scmp.eq.s32.totalorder %s29, 0
      %p77 = por %p75, %p76
      %s79 = sadd.s32 %s78, 1
      %p82 = scmp.eq.s32.totalorder %s23, 1
      %p83 = scmp.ne.s32.totalorder %s78, %s80
      %p84 = scmp.eq.s32.totalorder %s23, 0
      %p85 = por %p83, %p84
      %p86 = scmp.ne.s32.totalorder %s78, %s80
      %p87 = scmp.eq.s32.totalorder %s28, 1
      %p88 = por %p86, %p87
      %p89 = scmp.ne.s32.totalorder %s80, %s81
      %p90 = scmp.eq.s32.totalorder %s28, 0
      %p91 = por %p89, %p90
      %p92 = scmp.ne.s32.totalorder %s80, %s81
      %p93 = scmp.eq.s32.totalorder %s29, 1
      %p94 = por %p92, %p93
      %p96 = scmp.ne.s32.totalorder %s81, %s95
      %p97 = scmp.eq.s32.totalorder %s29, 0
      %p98 = por %p96, %p97
      %s100 = sadd.s32 %s99, 1
      %p103 = scmp.eq.s32.totalorder %s23, 1
      %p104 = scmp.ne.s32.totalorder %s99, %s101
      %p105 = scmp.eq.s32.totalorder %s23, 0
      %p106 = por %p104, %p105
      %p107 = scmp.ne.s32.totalorder %s99, %s101
      %p108 = scmp.eq.s32.totalorder %s28, 1
      %p109 = por %p107, %p108
      %p110 = scmp.ne.s32.totalorder %s101, %s102
      %p111 = scmp.eq.s32.totalorder %s28, 0
      %p112 = por %p110, %p111
      %p113 = scmp.ne.s32.totalorder %s101, %s102
      %p114 = scmp.eq.s32.totalorder %s29, 1
      %p115 = por %p113, %p114
      %p117 = scmp.ne.s32.totalorder %s102, %s116
      %p118 = scmp.eq.s32.totalorder %s29, 0
      %p119 = por %p117, %p118
      %s121 = sadd.s32 %s120, 1
      %p124 = scmp.eq.s32.totalorder %s23, 1
      %p125 = scmp.ne.s32.totalorder %s120, %s122
      %p126 = scmp.eq.s32.totalorder %s23, 0
      %p127 = por %p125, %p126
      %p128 = scmp.ne.s32.totalorder %s120, %s122
      %p129 = scmp.eq.s32.totalorder %s28, 1
      %p130 = por %p128, %p129
      %p131 = scmp.ne.s32.totalorder %s122, %s123
      %p132 = scmp.eq.s32.totalorder %s28, 0
      %p133 = por %p131, %p132
      %p134 = scmp.ne.s32.totalorder %s122, %s123
      %p135 = scmp.eq.s32.totalorder %s29, 1
      %p136 = por %p134, %p135
      %p138 = scmp.ne.s32.totalorder %s123, %s137
      %p139 = scmp.eq.s32.totalorder %s29, 0
      %p140 = por %p138, %p139
      %s142 = sadd.s32 %s141, 1
      %p145 = scmp.eq.s32.totalorder %s23, 1
      %p146 = scmp.ne.s32.totalorder %s141, %s143
      %p147 = scmp.eq.s32.totalorder %s23, 0
      %p148 = por %p146, %p147
      %p149 = scmp.ne.s32.totalorder %s141, %s143
      %p150 = scmp.eq.s32.totalorder %s28, 1
      %p151 = por %p149, %p150
      %p152 = scmp.ne.s32.totalorder %s143, %s144
      %p153 = scmp.eq.s32.totalorder %s28, 0
      %p154 = por %p152, %p153
      %p155 = scmp.ne.s32.totalorder %s143, %s144
      %p156 = scmp.eq.s32.totalorder %s29, 1
      %p157 = por %p155, %p156
      %p159 = scmp.ne.s32.totalorder %s144, %s158
      %p160 = scmp.eq.s32.totalorder %s29, 0
      %p161 = por %p159, %p160
      %s163 = sadd.s32 %s162, 1
      %p166 = scmp.eq.s32.totalorder %s23, 1
      %p167 = scmp.ne.s32.totalorder %s162, %s164
      %p168 = scmp.eq.s32.totalorder %s23, 0
      %p169 = por %p167, %p168
      %p170 = scmp.ne.s32.totalorder %s162, %s164
      %p171 = scmp.eq.s32.totalorder %s28, 1
      %p172 = por %p170, %p171
      %p173 = scmp.ne.s32.totalorder %s164, %s165
      %p174 = scmp.eq.s32.totalorder %s28, 0
      %p175 = por %p173, %p174
      %p176 = scmp.ne.s32.totalorder %s164, %s165
      %p177 = scmp.eq.s32.totalorder %s29, 1
      %p178 = por %p176, %p177
      %p180 = scmp.ne.s32.totalorder %s165, %s179
      %p181 = scmp.eq.s32.totalorder %s29, 0
      %p182 = por %p180, %p181
      %s184 = sadd.s32 %s183, 1
      %p187 = scmp.eq.s32.totalorder %s23, 1
      %p188 = scmp.ne.s32.totalorder %s183, %s185
      %p189 = scmp.eq.s32.totalorder %s23, 0
      %p190 = por %p188, %p189
      %p191 = scmp.ne.s32.totalorder %s183, %s185
      %p192 = scmp.eq.s32.totalorder %s28, 1
      %p193 = por %p191, %p192
      %p194 = scmp.ne.s32.totalorder %s185, %s186
      %p195 = scmp.eq.s32.totalorder %s28, 0
      %p196 = por %p194, %p195
      %p197 = scmp.ne.s32.totalorder %s185, %s186
      %p198 = scmp.eq.s32.totalorder %s29, 1
      %p199 = por %p197, %p198
      %p201 = scmp.ne.s32.totalorder %s186, %s200
      %p202 = scmp.eq.s32.totalorder %s29, 0
      %p203 = por %p201, %p202
      %s205 = sadd.s32 %s204, 1
      %p208 = scmp.eq.s32.totalorder %s23, 1
      %p209 = scmp.ne.s32.totalorder %s204, %s206
      %p210 = scmp.eq.s32.totalorder %s23, 0
      %p211 = por %p209, %p210
      %p212 = scmp.ne.s32.totalorder %s204, %s206
      %p213 = scmp.eq.s32.totalorder %s28, 1
      %p214 = por %p212, %p213
      %p215 = scmp.ne.s32.totalorder %s206, %s207
      %p216 = scmp.eq.s32.totalorder %s28, 0
      %p217 = por %p215, %p216
      %p218 = scmp.ne.s32.totalorder %s206, %s207
      %p219 = scmp.eq.s32.totalorder %s29, 1
      %p220 = por %p218, %p219
      %p222 = scmp.ne.s32.totalorder %s207, %s221
      %p223 = scmp.eq.s32.totalorder %s29, 0
      %p224 = por %p222, %p223
      %s225 = ssub.s32 %s23, %s30
      %p226 = scmp.eq.s32.totalorder %s225, 0
      %s228 = sadd.s32 %s227, 1
      %s229 = scalar_select %p226, %s227, %s228
      %p232 = pneg %p226
      %p233 = scmp.eq.s32.totalorder %s23, 1
      %p234 = por %p232, %p233
      %p235 = scmp.ne.s32.totalorder %s227, %s230
      %p236 = scmp.eq.s32.totalorder %s23, 0
      %p237 = por %p235, %p236
      %p238 = scmp.ne.s32.totalorder %s227, %s230
      %p239 = scmp.eq.s32.totalorder %s28, 1
      %p240 = por %p238, %p239
      %p241 = scmp.ne.s32.totalorder %s230, %s231
      %p242 = scmp.eq.s32.totalorder %s28, 0
      %p243 = por %p241, %p242
      %p244 = scmp.ne.s32.totalorder %s230, %s231
      %p245 = scmp.eq.s32.totalorder %s29, 1
      %p246 = por %p244, %p245
      %p248 = scmp.ne.s32.totalorder %s231, %s247
      %p249 = scmp.eq.s32.totalorder %s29, 0
      %p250 = por %p248, %p249
      %s251 = ssub.s32 %s23, %s30
      %p252 = scmp.eq.s32.totalorder %s251, 0
      %s254 = sadd.s32 %s253, 1
      %s255 = scalar_select %p252, %s253, %s254
      %p258 = pneg %p252
      %p259 = scmp.eq.s32.totalorder %s23, 1
      %p260 = por %p258, %p259
      %p261 = scmp.ne.s32.totalorder %s253, %s256
      %p262 = scmp.eq.s32.totalorder %s23, 0
      %p263 = por %p261, %p262
      %p264 = scmp.ne.s32.totalorder %s253, %s256
      %p265 = scmp.eq.s32.totalorder %s28, 1
      %p266 = por %p264, %p265
      %p267 = scmp.ne.s32.totalorder %s256, %s257
      %p268 = scmp.eq.s32.totalorder %s28, 0
      %p269 = por %p267, %p268
      %p270 = scmp.ne.s32.totalorder %s256, %s257
      %p271 = scmp.eq.s32.totalorder %s29, 1
      %p272 = por %p270, %p271
      %p274 = scmp.ne.s32.totalorder %s257, %s273
      %p275 = scmp.eq.s32.totalorder %s29, 0
      %p276 = por %p274, %p275
      %p277 = scmp.le.s32.totalorder 1, %s23
      %p278 = scmp.lt.s32.totalorder %s23, 3
      %p279 = pnand %p277, %p278
      %p280 = pneg %p279
      // Predicated region
      $region9: #{tpu_custom_call.1} parent=5 // pred_check
        _
      $region10: #{tpu_custom_call.1} parent=5 // pred_check_branch
        %282 = sbr.rel (%p279) target = $region12
      $region11: #{tpu_custom_call.1} parent=5 // pred_region
        %s283 = ssub.s32 %s23, 1
        // Predicated region
        $region13: #{tpu_custom_call.1} parent=11 // pred_check
          %p284 = pneg %p70
        $region14: #{tpu_custom_call.1} parent=11 // pred_check_branch
          %286 = sbr.rel (%p284) target = $region16
        $region15: #{tpu_custom_call.1} parent=11 // pred_region
          _
        $region16: #{tpu_custom_call.1} parent=11 // pred_fallthru
          _
        // Predicated region
        $region17: #{tpu_custom_call.1} parent=11 // pred_check
          %p287 = pneg %p91
        $region18: #{tpu_custom_call.1} parent=11 // pred_check_branch
          %289 = sbr.rel (%p287) target = $region20
        $region19: #{tpu_custom_call.1} parent=11 // pred_region
          _
        $region20: #{tpu_custom_call.1} parent=11 // pred_fallthru
          _
        // Predicated region
        $region21: #{tpu_custom_call.1} parent=11 // pred_check
          %p290 = pneg %p112
        $region22: #{tpu_custom_call.1} parent=11 // pred_check_branch
          %292 = sbr.rel (%p290) target = $region24
        $region23: #{tpu_custom_call.1} parent=11 // pred_region
          _
        $region24: #{tpu_custom_call.1} parent=11 // pred_fallthru
          _
        // Predicated region
        $region25: #{tpu_custom_call.1} parent=11 // pred_check
          %p293 = pneg %p133
        $region26: #{tpu_custom_call.1} parent=11 // pred_check_branch
          %295 = sbr.rel (%p293) target = $region28
        $region27: #{tpu_custom_call.1} parent=11 // pred_region
          _
        $region28: #{tpu_custom_call.1} parent=11 // pred_fallthru
          _
        // Predicated region
        $region29: #{tpu_custom_call.1} parent=11 // pred_check
          %p296 = pneg %p154
        $region30: #{tpu_custom_call.1} parent=11 // pred_check_branch
          %298 = sbr.rel (%p296) target = $region32
        $region31: #{tpu_custom_call.1} parent=11 // pred_region
          _
        $region32: #{tpu_custom_call.1} parent=11 // pred_fallthru
          _
        // Predicated region
        $region33: #{tpu_custom_call.1} parent=11 // pred_check
          %p299 = pneg %p175
        $region34: #{tpu_custom_call.1} parent=11 // pred_check_branch
          %301 = sbr.rel (%p299) target = $region36
        $region35: #{tpu_custom_call.1} parent=11 // pred_region
          _
        $region36: #{tpu_custom_call.1} parent=11 // pred_fallthru
          _
        // Predicated region
        $region37: #{tpu_custom_call.1} parent=11 // pred_check
          %p302 = pneg %p196
        $region38: #{tpu_custom_call.1} parent=11 // pred_check_branch
          %304 = sbr.rel (%p302) target = $region40
        $region39: #{tpu_custom_call.1} parent=11 // pred_region
          _
        $region40: #{tpu_custom_call.1} parent=11 // pred_fallthru
          _
        // Predicated region
        $region41: #{tpu_custom_call.1} parent=11 // pred_check
          %p305 = pneg %p217
        $region42: #{tpu_custom_call.1} parent=11 // pred_check_branch
          %307 = sbr.rel (%p305) target = $region44
        $region43: #{tpu_custom_call.1} parent=11 // pred_region
          _
        $region44: #{tpu_custom_call.1} parent=11 // pred_fallthru
          _
      $region12: #{tpu_custom_call.1} parent=5 // pred_fallthru
        _
      %p308 = scmp.lt.s32.totalorder %s23, 2
      // Predicated region
      $region45: #{tpu_custom_call.1} parent=5 // pred_check
        %p309 = pneg %p308
      $region46: #{tpu_custom_call.1} parent=5 // pred_check_branch
        %311 = sbr.rel (%p309) target = $region48
      $region47: #{tpu_custom_call.1} parent=5 // pred_region
        // Predicated region
        $region49: #{tpu_custom_call.1} parent=47 // pred_check
          %p312 = pneg %p43
        $region50: #{tpu_custom_call.1} parent=47 // pred_check_branch
          %314 = sbr.rel (%p312) target = $region52
        $region51: #{tpu_custom_call.1} parent=47 // pred_region
          %p315 = scmp.lt.s32.totalorder %s23, 1
          %s316 = scalar_select %p315, %s23, 1
          %s317 = smul.addr %s316, 3
          %s318 = smul.addr %s317, 8
          %s319 = scalar_lea.vmem %s0, %s318
        $region52: #{tpu_custom_call.1} parent=47 // pred_fallthru
          _
      $region48: #{tpu_custom_call.1} parent=5 // pred_fallthru
        _
      %p320 = scmp.le.s32.totalorder 1, %s23
      %p321 = scmp.lt.s32.totalorder %s23, 3
      %p322 = pnand %p320, %p321
      %p323 = pneg %p322
      // Predicated region
      $region53: #{tpu_custom_call.1} parent=5 // pred_check
        _
      $region54: #{tpu_custom_call.1} parent=5 // pred_check_branch
        %325 = sbr.rel (%p322) target = $region56
      $region55: #{tpu_custom_call.1} parent=5 // pred_region
        %s326 = ssub.s32 %s23, 1
        %p327 = scmp.lt.s32.totalorder %s28, 1
        %s328 = scalar_select %p327, %s28, 1
        %s329 = smul.addr %s328, 3
        %s330 = smul.addr %s329, 8
        %s331 = scalar_lea.vmem %s0, %s330
        %p332 = pneg %p49
        %p333 = pneg %p46
        %p334 = pneg %p70
        %p335 = pneg %p67
        %p336 = pneg %p91
        %p337 = pneg %p88
        %p338 = pneg %p112
        %p339 = pneg %p109
        %p340 = pneg %p133
        %p341 = pneg %p130
        %p342 = pneg %p154
        %p343 = pneg %p151
        %p344 = pneg %p175
        %p345 = pneg %p172
        %p346 = pneg %p196
        %p347 = pneg %p193
        %p348 = pneg %p217
        %p349 = pneg %p214
        %p350 = pneg %p243
        %p351 = pneg %p240
        %s352 = sand.u32 %s230, 1
        %s353 = scalar_lea.sflag [#allocation3], %s352
        %s354 = sand.u32 %s230, 1
        %s355 = smul.addr %s354, 16
        %s356 = scalar_lea.vmem [#allocation2], %s355
        %p357 = pneg %p269
        %p358 = pneg %p266
        %s359 = sand.u32 %s256, 1
        %s360 = scalar_lea.sflag [#allocation5], %s359
        %s361 = sand.u32 %s256, 1
        %s362 = smul.addr %s361, 16
        %s363 = scalar_lea.vmem [#allocation4], %s362
        %p364 = scmp.lt.s32.totalorder %s28, 1
        %s365 = scalar_select %p364, %s28, 1
        %s366 = smul.addr %s365, 3
        %s367 = smul.addr %s366, 8
        %s368 = scalar_lea.vmem %s0, %s367
        %v369 = vld [vmem:[%s368] sm:$0xff]
        %v370 = vld [vmem:[%s368 + $0x8] sm:$0xff]
        %v371 = vld [vmem:[%s368 + $0x10] sm:$0xf]
        %vm375 = vcmask 1045504
        %v376 = vrot.slane %v369, 2
        %v377 = vrot.slane %v370, 2
        %v378 = vsel %vm375, %v376, %v377
        %v379 = vrot.slane %v371, 2
        %v380 = vsel %vm375, %v377, %v379
        %381 = vrot.lane.b32.xlu0 %v378, 32
        %v382 = vpop.permute.xlu0 %381
        %383 = vrot.lane.b32.xlu0 %v380, 32
        %v384 = vpop.permute.xlu0 %383
        %vm387 = vcmask 1043456
        %v388 = vrot.slane %v369, 4
        %v389 = vrot.slane %v370, 4
        %v390 = vsel %vm387, %v388, %v389
        %v391 = vrot.slane %v371, 4
        %v392 = vsel %vm387, %v389, %v391
        %393 = vrot.lane.b32.xlu0 %v390, 64
        %v394 = vpop.permute.xlu0 %393
        %395 = vrot.lane.b32.xlu0 %v392, 64
        %v396 = vpop.permute.xlu0 %395
        %vm399 = vcmask 261120
        %v400 = vsel %vm399, %v369, %v382
        %v401 = vsel %vm399, %v370, %v384
        %vm402 = vcmask 523264
        %v403 = vsel %vm402, %v400, %v394
        %v404 = vsel %vm402, %v401, %v396
        %v405 = vld [vmem:[%s1] sm:$0xff]
        %v406 = vld [vmem:[%s1 + $0x8] sm:$0xff]
        %v407 = vld [vmem:[%s1 + $0x10] sm:$0xff]
        %v408 = vld [vmem:[%s1 + $0x18] sm:$0xff]
        %v409 = vld [vmem:[%s1 + $0x20] sm:$0xff]
        %v410 = vld [vmem:[%s1 + $0x28] sm:$0xff]
        %v411 = vld [vmem:[%s1 + $0x30] sm:$0xff]
        %v412 = vld [vmem:[%s1 + $0x38] sm:$0xff]
        %v413 = vld [vmem:[%s1 + $0x40] sm:$0xff]
        %v414 = vld [vmem:[%s1 + $0x48] sm:$0xff]
        %v415 = vld [vmem:[%s1 + $0x50] sm:$0xff]
        %v416 = vld [vmem:[%s1 + $0x58] sm:$0xff]
        %v417 = vld [vmem:[%s2] sm:$0x1]
        %v419 = vlaneseq
        %v420 = vshrl.u32 %v419, 7
        %v421 = vsub.s32 0, %v420
        %v422 = vrot.slane %v417, %v421
        %vm424 = vcmask 785408
        %v426 = vsel %vm424, %v403, 0
        %v429 = vsel %vm424, %v404, 0
        %431 = vmatprep.subr.mxu0 0.0
        %432 = vmatpush1.msra.mxu0 %v405
        %433 = vmatprep.subr.mxu0 0.0
        %434 = vmatpush1.msra.mxu0 %v406
        %435 = vmatprep.subr.mxu0 0.0
        %436 = vmatpush1.msra.mxu0 %v407
        %437 = vmatprep.subr.mxu0 0.0
        %438 = vmatpush1.msra.mxu0 %v408
        %439 = vmatprep.subr.mxu0 0.0
        %440 = vmatpush1.msra.mxu0 %v409
        %441 = vmatprep.subr.mxu0 0.0
        %442 = vmatpush1.msra.mxu0 %v410
        %443 = vmatprep.subr.mxu0 0.0
        %444 = vmatpush1.msra.mxu0 %v411
        %445 = vmatprep.subr.mxu0 0.0
        %446 = vmatpush1.msra.mxu0 %v412
        %447 = vmatprep.subr.mxu0 0.0
        %448 = vmatpush1.msra.mxu0 %v413
        %449 = vmatprep.subr.mxu0 0.0
        %450 = vmatpush1.msra.mxu0 %v414
        %451 = vmatprep.subr.mxu0 0.0
        %452 = vmatpush1.msra.mxu0 %v415
        %453 = vmatprep.subr.mxu0 0.0
        %454 = vmatpush1.msra.mxu0 %v416
        %455 = vmatprep.subr.mxu0 0.0
        %456 = vmatpush1.msra.mxu0 0.0
        %457 = vmatprep.subr.mxu0 0.0
        %458 = vmatpush1.msra.mxu0 0.0
        %459 = vmatprep.subr.mxu0 0.0
        %460 = vmatpush1.msra.mxu0 0.0
        %461 = vmatprep.subr.mxu0 0.0
        %462 = vmatpush1.msra.mxu0 0.0
        %463 = vmatprep.subr.mxu0 0.0
        %464 = vmatpush1.msra.mxu0 0.0
        %465 = vmatprep.subr.mxu0 0.0
        %466 = vmatpush1.msra.mxu0 0.0
        %467 = vmatprep.subr.mxu0 0.0
        %468 = vmatpush1.msra.mxu0 0.0
        %469 = vmatprep.subr.mxu0 0.0
        %470 = vmatpush1.msra.mxu0 0.0
        %471 = vmatprep.subr.mxu0 0.0
        %472 = vmatpush1.msra.mxu0 0.0
        %473 = vmatprep.subr.mxu0 0.0
        %474 = vmatpush1.msra.mxu0 0.0
        %475 = vmatprep.subr.mxu0 0.0
        %476 = vmatpush1.msra.mxu0 0.0
        %477 = vmatprep.subr.mxu0 0.0
        %478 = vmatpush1.msra.mxu0 0.0
        %479 = vmatprep.subr.mxu0 0.0
        %480 = vmatpush1.msra.mxu0 0.0
        %481 = vmatprep.subr.mxu0 0.0
        %482 = vmatpush1.msra.mxu0 0.0
        %483 = vmatprep.subr.mxu0 0.0
        %484 = vmatpush1.msra.mxu0 0.0
        %485 = vmatprep.subr.mxu0 0.0
        %486 = vmatpush1.msra.mxu0 0.0
        %487 = vmatprep.subr.mxu0 0.0
        %488 = vmatpush1.msra.mxu0 0.0
        %489 = vmatprep.subr.mxu0 0.0
        %490 = vmatpush1.msra.mxu0 0.0
        %491 = vmatprep.subr.mxu0 0.0
        %492 = vmatpush1.msra.mxu0 0.0
        %493 = vmatprep.subr.mxu0 0.0
        %494 = vmatpush1.msra.mxu0 0.0
        %495 = vmatprep.mubr.f32.mxu0 0.0
        %496 = vmatmul.mubr.f32.gmra.mrb[0].mxu0 %v426
        %v497 = vpop.f32.mrb[0].mxu0
        %v498 = vadd.f32 %v422, %v497
        %v499 = vpop.f32.mrb[0].mxu0
        %500 = vmatprep.mubr.f32.mxu0 0.0
        %501 = vmatmul.mubr.f32.gmra.mrb[0].mxu0 %v429
        %v502 = vpop.f32.mrb[0].mxu0
        %v503 = vadd.f32 %v422, %v502
        %v504 = vpop.f32.mrb[0].mxu0
        %505 = vdwg.mxu0
        %v506 = vld [vmem:[%s3] sm:$0xff]
        %v507 = vld [vmem:[%s3 + $0x8] sm:$0xff]
        %v508 = vld [vmem:[%s3 + $0x10] sm:$0xff]
        %v509 = vld [vmem:[%s3 + $0x18] sm:$0xff]
        %v510 = vld [vmem:[%s3 + $0x20] sm:$0xff]
        %v511 = vld [vmem:[%s3 + $0x28] sm:$0xff]
        %v512 = vld [vmem:[%s3 + $0x30] sm:$0xff]
        %v513 = vld [vmem:[%s3 + $0x38] sm:$0xff]
        %v514 = vld [vmem:[%s3 + $0x40] sm:$0xff]
        %v515 = vld [vmem:[%s3 + $0x48] sm:$0xff]
        %v516 = vld [vmem:[%s3 + $0x50] sm:$0xff]
        %v517 = vld [vmem:[%s3 + $0x58] sm:$0xff]
        %v518 = vld [vmem:[%s4] sm:$0x1]
        %v520 = vlaneseq
        %v521 = vshrl.u32 %v520, 7
        %v522 = vsub.s32 0, %v521
        %v523 = vrot.slane %v518, %v522
        %525 = vmatprep.subr.mxu0 0.0
        %526 = vmatpush1.msra.mxu0 %v506
        %527 = vmatprep.subr.mxu0 0.0
        %528 = vmatpush1.msra.mxu0 %v507
        %529 = vmatprep.subr.mxu0 0.0
        %530 = vmatpush1.msra.mxu0 %v508
        %531 = vmatprep.subr.mxu0 0.0
        %532 = vmatpush1.msra.mxu0 %v509
        %533 = vmatprep.subr.mxu0 0.0
        %534 = vmatpush1.msra.mxu0 %v510
        %535 = vmatprep.subr.mxu0 0.0
        %536 = vmatpush1.msra.mxu0 %v511
        %537 = vmatprep.subr.mxu0 0.0
        %538 = vmatpush1.msra.mxu0 %v512
        %539 = vmatprep.subr.mxu0 0.0
        %540 = vmatpush1.msra.mxu0 %v513
        %541 = vmatprep.subr.mxu0 0.0
        %542 = vmatpush1.msra.mxu0 %v514
        %543 = vmatprep.subr.mxu0 0.0
        %544 = vmatpush1.msra.mxu0 %v515
        %545 = vmatprep.subr.mxu0 0.0
        %546 = vmatpush1.msra.mxu0 %v516
        %547 = vmatprep.subr.mxu0 0.0
        %548 = vmatpush1.msra.mxu0 %v517
        %549 = vmatprep.subr.mxu0 0.0
        %550 = vmatpush1.msra.mxu0 0.0
        %551 = vmatprep.subr.mxu0 0.0
        %552 = vmatpush1.msra.mxu0 0.0
        %553 = vmatprep.subr.mxu0 0.0
        %554 = vmatpush1.msra.mxu0 0.0
        %555 = vmatprep.subr.mxu0 0.0
        %556 = vmatpush1.msra.mxu0 0.0
        %557 = vmatprep.subr.mxu0 0.0
        %558 = vmatpush1.msra.mxu0 0.0
        %559 = vmatprep.subr.mxu0 0.0
        %560 = vmatpush1.msra.mxu0 0.0
        %561 = vmatprep.subr.mxu0 0.0
        %562 = vmatpush1.msra.mxu0 0.0
        %563 = vmatprep.subr.mxu0 0.0
        %564 = vmatpush1.msra.mxu0 0.0
        %565 = vmatprep.subr.mxu0 0.0
        %566 = vmatpush1.msra.mxu0 0.0
        %567 = vmatprep.subr.mxu0 0.0
        %568 = vmatpush1.msra.mxu0 0.0
        %569 = vmatprep.subr.mxu0 0.0
        %570 = vmatpush1.msra.mxu0 0.0
        %571 = vmatprep.subr.mxu0 0.0
        %572 = vmatpush1.msra.mxu0 0.0
        %573 = vmatprep.subr.mxu0 0.0
        %574 = vmatpush1.msra.mxu0 0.0
        %575 = vmatprep.subr.mxu0 0.0
        %576 = vmatpush1.msra.mxu0 0.0
        %577 = vmatprep.subr.mxu0 0.0
        %578 = vmatpush1.msra.mxu0 0.0
        %579 = vmatprep.subr.mxu0 0.0
        %580 = vmatpush1.msra.mxu0 0.0
        %581 = vmatprep.subr.mxu0 0.0
        %582 = vmatpush1.msra.mxu0 0.0
        %583 = vmatprep.subr.mxu0 0.0
        %584 = vmatpush1.msra.mxu0 0.0
        %585 = vmatprep.subr.mxu0 0.0
        %586 = vmatpush1.msra.mxu0 0.0
        %587 = vmatprep.subr.mxu0 0.0
        %588 = vmatpush1.msra.mxu0 0.0
        %589 = vmatprep.mubr.f32.mxu0 0.0
        %590 = vmatmul.mubr.f32.gmra.mrb[0].mxu0 %v426
        %v591 = vpop.f32.mrb[0].mxu0
        %v592 = vadd.f32 %v523, %v591
        %v593 = vpop.f32.mrb[0].mxu0
        %594 = vmatprep.mubr.f32.mxu0 0.0
        %595 = vmatmul.mubr.f32.gmra.mrb[0].mxu0 %v429
        %v596 = vpop.f32.mrb[0].mxu0
        %v597 = vadd.f32 %v523, %v596
        %v598 = vpop.f32.mrb[0].mxu0
        %599 = vdwg.mxu0
        %v600 = vtanh.pop %v498
        %v601 = vtanh.pop %v503
        %v602 = vsub.f32 0.0, %v592
        %v603 = vsub.f32 0.0, %v597
        %v604 = vmul.f32 %v602, 1.442695
        %v605 = vpow.pop %v604
        %v606 = vmul.f32 %v603, 1.442695
        %v607 = vpow.pop %v606
        %v608 = vadd.f32 %v605, 1.0
        %v609 = vadd.f32 %v607, 1.0
        %v610 = vrcp.pop %v608
        %v611 = vmul.f32 1.0, %v610
        %v612 = vrcp.pop %v609
        %v613 = vmul.f32 1.0, %v612
        %v614 = vmul.f32 %v600, %v611
        %v615 = vmul.f32 %v601, %v613
        %v616 = vld [vmem:[%s7] sm:$0xff]
        %v617 = vld [vmem:[%s7 + $0x8] sm:$0xff]
        %v618 = vld [vmem:[%s7 + $0x10] sm:$0xff]
        %v619 = vld [vmem:[%s7 + $0x18] sm:$0xff]
        %v620 = vld [vmem:[%s8] sm:$0x1]
        %v622 = vlaneseq
        %v623 = vshrl.u32 %v622, 7
        %v624 = vsub.s32 0, %v623
        %v625 = vrot.slane %v620, %v624
        %v628 = vsel %vm399, %v614, 0
        %v631 = vsel %vm399, %v615, 0
        %633 = vmatprep.subr.mxu0 0.0
        %634 = vmatpush1.msra.mxu0 %v616
        %635 = vmatprep.subr.mxu0 0.0
        %636 = vmatpush1.msra.mxu0 %v617
        %637 = vmatprep.subr.mxu0 0.0
        %638 = vmatpush1.msra.mxu0 %v618
        %639 = vmatprep.subr.mxu0 0.0
        %640 = vmatpush1.msra.mxu0 %v619
        %641 = vmatprep.subr.mxu0 0.0
        %642 = vmatpush1.msra.mxu0 0.0
        %643 = vmatprep.subr.mxu0 0.0
        %644 = vmatpush1.msra.mxu0 0.0
        %645 = vmatprep.subr.mxu0 0.0
        %646 = vmatpush1.msra.mxu0 0.0
        %647 = vmatprep.subr.mxu0 0.0
        %648 = vmatpush1.msra.mxu0 0.0
        %649 = vmatprep.subr.mxu0 0.0
        %650 = vmatpush1.msra.mxu0 0.0
        %651 = vmatprep.subr.mxu0 0.0
        %652 = vmatpush1.msra.mxu0 0.0
        %653 = vmatprep.subr.mxu0 0.0
        %654 = vmatpush1.msra.mxu0 0.0
        %655 = vmatprep.subr.mxu0 0.0
        %656 = vmatpush1.msra.mxu0 0.0
        %657 = vmatprep.subr.mxu0 0.0
        %658 = vmatpush1.msra.mxu0 0.0
        %659 = vmatprep.subr.mxu0 0.0
        %660 = vmatpush1.msra.mxu0 0.0
        %661 = vmatprep.subr.mxu0 0.0
        %662 = vmatpush1.msra.mxu0 0.0
        %663 = vmatprep.subr.mxu0 0.0
        %664 = vmatpush1.msra.mxu0 0.0
        %665 = vmatprep.subr.mxu0 0.0
        %666 = vmatpush1.msra.mxu0 0.0
        %667 = vmatprep.subr.mxu0 0.0
        %668 = vmatpush1.msra.mxu0 0.0
        %669 = vmatprep.subr.mxu0 0.0
        %670 = vmatpush1.msra.mxu0 0.0
        %671 = vmatprep.subr.mxu0 0.0
        %672 = vmatpush1.msra.mxu0 0.0
        %673 = vmatprep.subr.mxu0 0.0
        %674 = vmatpush1.msra.mxu0 0.0
        %675 = vmatprep.subr.mxu0 0.0
        %676 = vmatpush1.msra.mxu0 0.0
        %677 = vmatprep.subr.mxu0 0.0
        %678 = vmatpush1.msra.mxu0 0.0
        %679 = vmatprep.subr.mxu0 0.0
        %680 = vmatpush1.msra.mxu0 0.0
        %681 = vmatprep.subr.mxu0 0.0
        %682 = vmatpush1.msra.mxu0 0.0
        %683 = vmatprep.subr.mxu0 0.0
        %684 = vmatpush1.msra.mxu0 0.0
        %685 = vmatprep.subr.mxu0 0.0
        %686 = vmatpush1.msra.mxu0 0.0
        %687 = vmatprep.subr.mxu0 0.0
        %688 = vmatpush1.msra.mxu0 0.0
        %689 = vmatprep.subr.mxu0 0.0
        %690 = vmatpush1.msra.mxu0 0.0
        %691 = vmatprep.subr.mxu0 0.0
        %692 = vmatpush1.msra.mxu0 0.0
        %693 = vmatprep.subr.mxu0 0.0
        %694 = vmatpush1.msra.mxu0 0.0
        %695 = vmatprep.subr.mxu0 0.0
        %696 = vmatpush1.msra.mxu0 0.0
        %697 = vmatprep.mubr.f32.mxu0 0.0
        %698 = vmatmul.mubr.f32.gmra.mrb[0].mxu0 %v628
        %v699 = vpop.f32.mrb[0].mxu0
        %v700 = vadd.f32 %v625, %v699
        %v701 = vpop.f32.mrb[0].mxu0
        %702 = vmatprep.mubr.f32.mxu0 0.0
        %703 = vmatmul.mubr.f32.gmra.mrb[0].mxu0 %v631
        %v704 = vpop.f32.mrb[0].mxu0
        %v705 = vadd.f32 %v625, %v704
        %v706 = vpop.f32.mrb[0].mxu0
        %707 = vdwg.mxu0
        %v708 = vld [vmem:[%s5] sm:$0xff]
        %v709 = vld [vmem:[%s5 + $0x8] sm:$0xff]
        %v710 = vld [vmem:[%s5 + $0x10] sm:$0xff]
        %v711 = vld [vmem:[%s5 + $0x18] sm:$0xff]
        %v712 = vld [vmem:[%s6] sm:$0x1]
        %v714 = vlaneseq
        %v715 = vshrl.u32 %v714, 7
        %v716 = vsub.s32 0, %v715
        %v717 = vrot.slane %v712, %v716
        %719 = vmatprep.subr.mxu0 0.0
        %720 = vmatpush1.msra.mxu0 %v708
        %721 = vmatprep.subr.mxu0 0.0
        %722 = vmatpush1.msra.mxu0 %v709
        %723 = vmatprep.subr.mxu0 0.0
        %724 = vmatpush1.msra.mxu0 %v710
        %725 = vmatprep.subr.mxu0 0.0
        %726 = vmatpush1.msra.mxu0 %v711
        %727 = vmatprep.subr.mxu0 0.0
        %728 = vmatpush1.msra.mxu0 0.0
        %729 = vmatprep.subr.mxu0 0.0
        %730 = vmatpush1.msra.mxu0 0.0
        %731 = vmatprep.subr.mxu0 0.0
        %732 = vmatpush1.msra.mxu0 0.0
        %733 = vmatprep.subr.mxu0 0.0
        %734 = vmatpush1.msra.mxu0 0.0
        %735 = vmatprep.subr.mxu0 0.0
        %736 = vmatpush1.msra.mxu0 0.0
        %737 = vmatprep.subr.mxu0 0.0
        %738 = vmatpush1.msra.mxu0 0.0
        %739 = vmatprep.subr.mxu0 0.0
        %740 = vmatpush1.msra.mxu0 0.0
        %741 = vmatprep.subr.mxu0 0.0
        %742 = vmatpush1.msra.mxu0 0.0
        %743 = vmatprep.subr.mxu0 0.0
        %744 = vmatpush1.msra.mxu0 0.0
        %745 = vmatprep.subr.mxu0 0.0
        %746 = vmatpush1.msra.mxu0 0.0
        %747 = vmatprep.subr.mxu0 0.0
        %748 = vmatpush1.msra.mxu0 0.0
        %749 = vmatprep.subr.mxu0 0.0
        %750 = vmatpush1.msra.mxu0 0.0
        %751 = vmatprep.subr.mxu0 0.0
        %752 = vmatpush1.msra.mxu0 0.0
        %753 = vmatprep.subr.mxu0 0.0
        %754 = vmatpush1.msra.mxu0 0.0
        %755 = vmatprep.subr.mxu0 0.0
        %756 = vmatpush1.msra.mxu0 0.0
        %757 = vmatprep.subr.mxu0 0.0
        %758 = vmatpush1.msra.mxu0 0.0
        %759 = vmatprep.subr.mxu0 0.0
        %760 = vmatpush1.msra.mxu0 0.0
        %761 = vmatprep.subr.mxu0 0.0
        %762 = vmatpush1.msra.mxu0 0.0
        %763 = vmatprep.subr.mxu0 0.0
        %764 = vmatpush1.msra.mxu0 0.0
        %765 = vmatprep.subr.mxu0 0.0
        %766 = vmatpush1.msra.mxu0 0.0
        %767 = vmatprep.subr.mxu0 0.0
        %768 = vmatpush1.msra.mxu0 0.0
        %769 = vmatprep.subr.mxu0 0.0
        %770 = vmatpush1.msra.mxu0 0.0
        %771 = vmatprep.subr.mxu0 0.0
        %772 = vmatpush1.msra.mxu0 0.0
        %773 = vmatprep.subr.mxu0 0.0
        %774 = vmatpush1.msra.mxu0 0.0
        %775 = vmatprep.subr.mxu0 0.0
        %776 = vmatpush1.msra.mxu0 0.0
        %777 = vmatprep.subr.mxu0 0.0
        %778 = vmatpush1.msra.mxu0 0.0
        %779 = vmatprep.subr.mxu0 0.0
        %780 = vmatpush1.msra.mxu0 0.0
        %781 = vmatprep.subr.mxu0 0.0
        %782 = vmatpush1.msra.mxu0 0.0
        %783 = vmatprep.mubr.f32.mxu0 0.0
        %784 = vmatmul.mubr.f32.gmra.mrb[0].mxu0 %v628
        %v785 = vpop.f32.mrb[0].mxu0
        %v786 = vadd.f32 %v717, %v785
        %v787 = vpop.f32.mrb[0].mxu0
        %788 = vmatprep.mubr.f32.mxu0 0.0
        %789 = vmatmul.mubr.f32.gmra.mrb[0].mxu0 %v631
        %v790 = vpop.f32.mrb[0].mxu0
        %v791 = vadd.f32 %v717, %v790
        %v792 = vpop.f32.mrb[0].mxu0
        %793 = vdwg.mxu0
        %v796 = vadd.f32 %v786, %v378
        %v797 = vadd.f32 %v791, %v380
        %v798 = vmul.f32 %v796, 0.70710677
        %v799 = vmul.f32 %v797, 0.70710677
        %800 = vst.msk [vmem:[%s356] sm:$0xff] %vm399, %v798
        %801 = vst.msk [vmem:[%s356 + $0x8] sm:$0xff] %vm399, %v799
        %802 = vst.msk [vmem:[%s363] sm:$0xff] %vm399, %v700
        %803 = vst.msk [vmem:[%s363 + $0x8] sm:$0xff] %vm399, %v705
        %s804 = sand.u32 %s230, 1
        %s805 = scalar_lea.sflag [#allocation3], %s804
        %s806 = sand.u32 %s230, 1
        %s807 = smul.addr %s806, 16
        %s808 = scalar_lea.vmem [#allocation2], %s807
        %s809 = sand.u32 %s256, 1
        %s810 = scalar_lea.sflag [#allocation5], %s809
        %s811 = sand.u32 %s256, 1
        %s812 = smul.addr %s811, 16
        %s813 = scalar_lea.vmem [#allocation4], %s812
        // Predicated region
        $region57: #{tpu_custom_call.1} parent=55 // pred_check
          %p814 = pneg %p240
        $region58: #{tpu_custom_call.1} parent=55 // pred_check_branch
          %816 = sbr.rel (%p814) target = $region60
        $region59: #{tpu_custom_call.1} parent=55 // pred_region
          %s818 = ssub.s32 256, 256
          %819 = vsyncadd %s805, %s818
          %s820 = smul.addr %s28, 2
          %s821 = smul.addr %s820, 128
          %s822 = scalar_lea.hbm %s9, %s821
          %s823 = sshll.u32 %s808, 4
          %s824 = int_to_ptr.vmem [resolvable:$true] %s823
          %829 = dma.vmem_to_hbm [thread:$0]  %s824, 256, %s822, %s805, 128, 128, 8
        $region60: #{tpu_custom_call.1} parent=55 // pred_fallthru
          _
        // Predicated region
        $region61: #{tpu_custom_call.1} parent=55 // pred_check
          %p830 = pneg %p266
        $region62: #{tpu_custom_call.1} parent=55 // pred_check_branch
          %832 = sbr.rel (%p830) target = $region64
        $region63: #{tpu_custom_call.1} parent=55 // pred_region
          %s834 = ssub.s32 256, 256
          %835 = vsyncadd %s810, %s834
          %s836 = smul.addr %s28, 2
          %s837 = smul.addr %s836, 128
          %s838 = scalar_lea.hbm %s10, %s837
          %s839 = sshll.u32 %s813, 4
          %s840 = int_to_ptr.vmem [resolvable:$true] %s839
          %845 = dma.vmem_to_hbm [thread:$0]  %s840, 256, %s838, %s810, 128, 128, 8
        $region64: #{tpu_custom_call.1} parent=55 // pred_fallthru
          _
      $region56: #{tpu_custom_call.1} parent=5 // pred_fallthru
        _
      %p846 = scmp.le.s32.totalorder 2, %s23
      // Predicated region
      $region65: #{tpu_custom_call.1} parent=5 // pred_check
        %p847 = pneg %p846
      $region66: #{tpu_custom_call.1} parent=5 // pred_check_branch
        %849 = sbr.rel (%p847) target = $region68
      $region67: #{tpu_custom_call.1} parent=5 // pred_region
        %s850 = ssub.s32 %s23, 2
        // Predicated region
        $region69: #{tpu_custom_call.1} parent=67 // pred_check
          %p851 = pneg %p246
        $region70: #{tpu_custom_call.1} parent=67 // pred_check_branch
          %853 = sbr.rel (%p851) target = $region72
        $region71: #{tpu_custom_call.1} parent=67 // pred_region
          %s854 = sand.u32 %s231, 1
          %s855 = scalar_lea.sflag [#allocation3], %s854
          %s856 = sand.u32 %s231, 1
          %s857 = smul.addr %s856, 16
          %s858 = scalar_lea.vmem [#allocation2], %s857
          %859 = dma.done %s855, 256
        $region72: #{tpu_custom_call.1} parent=67 // pred_fallthru
          _
        // Predicated region
        $region73: #{tpu_custom_call.1} parent=67 // pred_check
          %p860 = pneg %p272
        $region74: #{tpu_custom_call.1} parent=67 // pred_check_branch
          %862 = sbr.rel (%p860) target = $region76
        $region75: #{tpu_custom_call.1} parent=67 // pred_region
          %s863 = sand.u32 %s257, 1
          %s864 = scalar_lea.sflag [#allocation5], %s863
          %s865 = sand.u32 %s257, 1
          %s866 = smul.addr %s865, 16
          %s867 = scalar_lea.vmem [#allocation4], %s866
          %868 = dma.done %s864, 256
        $region76: #{tpu_custom_call.1} parent=67 // pred_fallthru
          _
      $region68: #{tpu_custom_call.1} parent=5 // pred_fallthru
        _
    $region6: #{tpu_custom_call.1} parent=1 // loop_footer
      %s27 = sadd.s32 1, %s23
    $region7: #{tpu_custom_call.1} parent=1 // loop_footer_branch
      %22 = sbr.rel target = $region3
    $region8: #{tpu_custom_call.1} parent=1 // loop_exit
      _
    %869 = vsyncpa [#allocation3], 1
    %s870 = scalar_lea.sflag [#allocation3], 1
    %871 = vsyncpa %s870, 1
    %872 = vsyncpa [#allocation5], 1
    %s873 = scalar_lea.sflag [#allocation5], 1
    %874 = vsyncpa %s873, 1

</llo_original>
